<compile_context>
chip_gen: v5e
topology: v5e:2x2
jax: 0.10.0
libtpu: 0.0.40
codegen_flags: <defaults>
</compile_context>

<pallas_src>
import functools

import jax
import jax.numpy as jnp
from jax.experimental import pallas as pl
from jax.experimental.pallas import tpu as pltpu

LANE = 128   # lane width / feature padding
TM = 128     # dst-row tile
TK = 128     # src-col tile (reduction)
TH = 128     # src-row tile for the feature transform


def _round_up(x, m):
    return (x + m - 1) // m * m


def _pad2d(a, rows, cols):
    r, c = a.shape
    return jnp.pad(a, ((0, rows - r), (0, cols - c)))


# ---------------------------------------------------------------------------
# Stage 1: H[r] = maybe_relu(X[r]) @ W[r]        (hoisted out of the A loop)
# ---------------------------------------------------------------------------
def _xw_kernel(x_ref, w_ref, o_ref, *, apply_relu):
    x = x_ref[0]
    if apply_relu:
        x = jnp.maximum(x, 0.0)
    h = jnp.dot(x, w_ref[0], preferred_element_type=jnp.float32)
    o_ref[0] = h.astype(o_ref.dtype)


def feature_transform(x_stack, w_stack, *, apply_relu):
    """x_stack: (R, Ns, Fin) f32, w_stack: (R, Fin, Fout) f32 -> (R, Ns, Fout) bf16."""
    r, ns, fin = x_stack.shape
    fout = w_stack.shape[-1]
    kernel = functools.partial(_xw_kernel, apply_relu=apply_relu)
    return pl.pallas_call(
        kernel,
        out_shape=jax.ShapeDtypeStruct((r, ns, fout), jnp.bfloat16),
        grid_spec=pltpu.PrefetchScalarGridSpec(
            num_scalar_prefetch=0,
            grid=(r, ns // TH),
            in_specs=[
                pl.BlockSpec((1, TH, fin), lambda rr, i: (rr, i, 0)),
                pl.BlockSpec((1, fin, fout), lambda rr, i: (rr, 0, 0)),
            ],
            out_specs=pl.BlockSpec((1, TH, fout), lambda rr, i: (rr, i, 0)),
        ),
        compiler_params=pltpu.CompilerParams(
            dimension_semantics=("parallel", "parallel"),
            vmem_limit_bytes=32 * 1024 * 1024),
    )(x_stack, w_stack)


# ---------------------------------------------------------------------------
# Stage 2: out = sum_r A[r] @ H[r] + b_sum   (HeteroGraphConv 'sum' fused in-kernel)
# ---------------------------------------------------------------------------
def _agg_kernel(a_ref, h_ref, b_ref, o_ref, acc_ref):
    r = pl.program_id(1)
    k = pl.program_id(2)

    @pl.when(jnp.logical_and(r == 0, k == 0))
    def _():
        acc_ref[...] = jnp.zeros_like(acc_ref)

    acc_ref[...] += jnp.dot(a_ref[0], h_ref[0], preferred_element_type=jnp.float32)

    @pl.when(jnp.logical_and(r == pl.num_programs(1) - 1,
                             k == pl.num_programs(2) - 1))
    def _():
        # Bias only in the epilogue (summed per-relation biases).
        o_ref[...] = acc_ref[...] + b_ref[...]


def aggregate(a_stack, h_stack, b_sum):
    """a_stack (R, Nd, Ns) bf16, h_stack (R, Ns, F) bf16, b_sum (1, F) f32 -> (Nd, F) f32."""
    r, nd, ns = a_stack.shape
    f = h_stack.shape[-1]
    return pl.pallas_call(
        _agg_kernel,
        out_shape=jax.ShapeDtypeStruct((nd, f), jnp.float32),
        grid_spec=pltpu.PrefetchScalarGridSpec(
            num_scalar_prefetch=0,
            grid=(nd // TM, r, ns // TK),          # reduction axes (relation, src) last
            in_specs=[
                pl.BlockSpec((1, TM, TK), lambda i, rr, k: (rr, i, k)),
                pl.BlockSpec((1, TK, f), lambda i, rr, k: (rr, k, 0)),
                pl.BlockSpec((1, f), lambda i, rr, k: (0, 0)),
            ],
            out_specs=pl.BlockSpec((TM, f), lambda i, rr, k: (i, 0)),
            scratch_shapes=[pltpu.VMEM((TM, f), jnp.float32)],
        ),
        compiler_params=pltpu.CompilerParams(
            dimension_semantics=("parallel", "arbitrary", "arbitrary"),
            vmem_limit_bytes=32 * 1024 * 1024),
    )(a_stack, h_stack, b_sum)


# ---------------------------------------------------------------------------
# Graph preparation and HeteroGraphConv glue
# ---------------------------------------------------------------------------
def prepare_graph(graph, ntype_sizes):
    """graph: dict (src_t, rel, dst_t) -> dense A_norm (n_dst, n_src) f32."""
    n_pad = _round_up(max(ntype_sizes.values()), max(TM, TK, TH))
    # Order relations grouped by dst type so per-dst H slices are contiguous.
    rel_order = sorted(graph.keys(), key=lambda k: (k[2], k[1], k[0]))
    dst_slices = {}
    for idx, (_, _, dst_t) in enumerate(rel_order):
        lo, _ = dst_slices.get(dst_t, (idx, idx))
        dst_slices[dst_t] = (lo, idx + 1)
    a_stacks = {
        dst_t: jnp.stack([
            _pad2d(graph[rel_order[i]], n_pad, n_pad).astype(jnp.bfloat16)
            for i in range(lo, hi)])
        for dst_t, (lo, hi) in dst_slices.items()
    }
    return rel_order, dst_slices, a_stacks, n_pad


def hetero_layer(prepared, feats_pad, weights, biases, *, apply_relu):
    """One HeteroGraphConv(aggregate='sum') layer on padded features."""
    rel_order, dst_slices, a_stacks, _ = prepared
    f_in, f_out = next(iter(weights.values())).shape
    fin_pad = _round_up(f_in, LANE)
    fout_pad = _round_up(f_out, LANE)

    # One stage-1 call for all relations of the layer.
    x_stack = jnp.stack([feats_pad[src_t] for (src_t, _, _) in rel_order])
    w_stack = jnp.stack([_pad2d(weights[rel], fin_pad, fout_pad)
                         for (_, rel, _) in rel_order])
    h_all = feature_transform(x_stack, w_stack, apply_relu=apply_relu)

    out = {}
    for dst_t, (lo, hi) in dst_slices.items():
        h_slice = jax.lax.slice_in_dim(h_all, lo, hi, axis=0)
        b = sum(biases[rel_order[i][1]] for i in range(lo, hi))   # per-relation bias, once each
        b_sum = jnp.pad(b, (0, fout_pad - f_out)).reshape(1, fout_pad).astype(jnp.float32)
        out[dst_t] = aggregate(a_stacks[dst_t], h_slice, b_sum)
    return out


def rgcn_forward(prepared, inputs, params, ntype_sizes):
    _, _, _, n_pad = prepared
    in_feats = next(iter(inputs.values())).shape[1]
    fin_pad = _round_up(in_feats, LANE)
    feats_pad = {nt: _pad2d(x.astype(jnp.float32), n_pad, fin_pad)
                 for nt, x in inputs.items()}
    # h = conv1(graph, inputs)
    h1 = hetero_layer(prepared, feats_pad, params["w1"], params["b1"], apply_relu=False)
    # h = {k: relu(v)}; h = conv2(graph, h)   (ReLU fused into layer-2 stage-1 kernel)
    h2 = hetero_layer(prepared, h1, params["w2"], params["b2"], apply_relu=True)
    out_feats = next(iter(params["w2"].values())).shape[1]
    return {nt: y[:ntype_sizes[nt], :out_feats] for nt, y in h2.items()}


# ---------------------------------------------------------------------------
# Deterministic setup
# ---------------------------------------------------------------------------
def _xavier(key, shape):
    fan_in, fan_out = shape
    limit = (6.0 / (fan_in + fan_out)) ** 0.5
    return jax.random.uniform(key, shape, jnp.float32, -limit, limit)


def _make_norm_adj(key, n_dst, n_src, p=0.3):
    # NOTE: degree clipping to 1.0 differs from DGL's zero-in-degree error/zeroing;
    # acceptable for this synthetic demo graph.
    a = (jax.random.uniform(key, (n_dst, n_src)) < p).astype(jnp.float32)
    in_deg = jnp.clip(a.sum(axis=1, keepdims=True), 1.0, None)   # (N_dst, 1)
    out_deg = jnp.clip(a.sum(axis=0, keepdims=True), 1.0, None)  # (1, N_src)
    return a / jnp.sqrt(in_deg * out_deg)                        # norm='both'


if __name__ == "__main__":
    key = jax.random.PRNGKey(0)

    # Small heterograph: two node types, three relations.
    in_feats, hid_feats, out_feats = 8, 16, 8
    n_user, n_item = 16, 16
    ntype_sizes = {"user": n_user, "item": n_item}
    rel_names = [("user", "follows", "user"),
                 ("user", "buys", "item"),
                 ("item", "bought_by", "user")]

    keys = jax.random.split(key, 32)
    ki = iter(keys)

    # Node features.
    inputs = {nt: jax.random.normal(next(ki), (n, in_feats), jnp.float32)
              for nt, n in ntype_sizes.items()}

    # Dense normalized adjacencies per relation: (N_dst, N_src).
    graph = {}
    for (src_t, rel, dst_t) in rel_names:
        graph[(src_t, rel, dst_t)] = _make_norm_adj(
            next(ki), ntype_sizes[dst_t], ntype_sizes[src_t])

    # Per-relation GraphConv parameters for both layers (deterministic init).
    params = {"w1": {}, "b1": {}, "w2": {}, "b2": {}}
    for (_, rel, _) in rel_names:
        params["w1"][rel] = _xavier(next(ki), (in_feats, hid_feats))
        params["b1"][rel] = jnp.zeros((hid_feats,), jnp.float32)
        params["w2"][rel] = _xavier(next(ki), (hid_feats, out_feats))
        params["b2"][rel] = jnp.zeros((out_feats,), jnp.float32)

    prepared = prepare_graph(graph, ntype_sizes)
    out = rgcn_forward(prepared, inputs, params, ntype_sizes)
    out = {k: jax.block_until_ready(v) for k, v in out.items()}

    assert out["user"].shape == (n_user, out_feats)
    assert out["item"].shape == (n_item, out_feats)
    print("KERNEL_OK")
</pallas_src>

<mosaic_0001>
module attributes {stable_mosaic.version = 11 : i64} {
  func.func @_xw_kernel(%arg0: i32, %arg1: i32, %arg2: memref<1x128x128xf32, #tpu.memory_space<vmem>>, %arg3: memref<1x128x128xf32, #tpu.memory_space<vmem>>, %arg4: memref<1x128x128xbf16, #tpu.memory_space<vmem>>) attributes {dimension_semantics = [#tpu.dimension_semantics<parallel>, #tpu.dimension_semantics<parallel>], iteration_bounds = array<i64: 3, 1>, scalar_prefetch = 0 : i64, scratch_operands = 0 : i64, tpu.core_type = #tpu.core_type<tc>, window_params = [{transform_indices = @transform_0, window_bounds = array<i64: 1, 128, 128>}, {transform_indices = @transform_1, window_bounds = array<i64: 1, 128, 128>}, {transform_indices = @transform_2, window_bounds = array<i64: 1, 128, 128>}]} {
    %c0 = arith.constant 0 : index
    %c0_0 = arith.constant 0 : index
    %c0_1 = arith.constant 0 : index
    %0 = vector.load %arg2[%c0, %c0_0, %c0_1] : memref<1x128x128xf32, #tpu.memory_space<vmem>>, vector<1x128x128xf32>
    %1 = vector.shape_cast %0 : vector<1x128x128xf32> to vector<128x128xf32>
    %c0_2 = arith.constant 0 : index
    %c0_3 = arith.constant 0 : index
    %c0_4 = arith.constant 0 : index
    %2 = vector.load %arg3[%c0_2, %c0_3, %c0_4] : memref<1x128x128xf32, #tpu.memory_space<vmem>>, vector<1x128x128xf32>
    %3 = vector.shape_cast %2 : vector<1x128x128xf32> to vector<128x128xf32>
    %cst = arith.constant dense<0.000000e+00> : vector<128x128xf32>
    %4 = tpu.matmul %1, %3, %cst {dimension_numbers = #tpu.dot_dimension_numbers<[1], [0], [0], [1], [0, 0, 1, 1], [], []>} : vector<128x128xf32>, vector<128x128xf32>, vector<128x128xf32> -> vector<128x128xf32>
    %5 = arith.truncf %4 : vector<128x128xf32> to vector<128x128xbf16>
    %c0_5 = arith.constant 0 : index
    %c0_6 = arith.constant 0 : index
    %c0_7 = arith.constant 0 : index
    %6 = vector.load %arg4[%c0_5, %c0_6, %c0_7] : memref<1x128x128xbf16, #tpu.memory_space<vmem>>, vector<1x128x128xbf16>
    %7 = vector.shape_cast %6 : vector<1x128x128xbf16> to vector<128x128xbf16>
    %8 = vector.shape_cast %5 : vector<128x128xbf16> to vector<1x128x128xbf16>
    tpu.vector_store %arg4[%c0_5, %c0_6, %c0_7], %8 {strides = array<i32>} : memref<1x128x128xbf16, #tpu.memory_space<vmem>>, vector<1x128x128xbf16>,
    return
  }
  func.func @transform_0(%arg0: i32, %arg1: i32) -> (i32, i32, i32) {
    %c0_i32 = arith.constant 0 : i32
    %c0_i32_0 = arith.constant 0 : i32
    return %arg0, %arg1, %c0_i32 : i32, i32, i32
  }
  func.func @transform_1(%arg0: i32, %arg1: i32) -> (i32, i32, i32) {
    %c0_i32 = arith.constant 0 : i32
    %c0_i32_0 = arith.constant 0 : i32
    %c0_i32_1 = arith.constant 0 : i32
    return %arg0, %c0_i32, %c0_i32_0 : i32, i32, i32
  }
  func.func @transform_2(%arg0: i32, %arg1: i32) -> (i32, i32, i32) {
    %c0_i32 = arith.constant 0 : i32
    %c0_i32_0 = arith.constant 0 : i32
    return %arg0, %arg1, %c0_i32 : i32, i32, i32
  }
}

</mosaic_0001>

<llo_original>
// kernel: tpu_custom_call.1
$region0: #{tpu_custom_call.1}
  #allocation0 [shape = 'u32[]', space=smem, size = 0x4, offset = 0x4, fixed_abs, tag = 'smem constant byte address 0x4 - core index']
  #allocation1 [shape = 'u32[72,128]{1,0:T(1,128)}', space=vmem, size = 0x9000, scoped, tag = 'internal scratch']
  %s0 = inlined_call_operand.hbm [shape: f32[3,128,128], index: 0, kind: input, shape index: {}]
  %s1 = inlined_call_operand.hbm [shape: f32[3,128,128], index: 1, kind: input, shape index: {}]
  %s2 = inlined_call_operand.hbm [shape: bf16[3,128,128], index: 2, kind: output, shape index: {}]
  %s3 = sld [smem:[#allocation0]]
  $region49: #{tpu_custom_call.1} parent=0
    _
  %s5 = ssub.s32 1, %s3
  %s6 = scalar_select 0, %s5, %s3
  $region1: #{tpu_custom_call.1} parent=0
    #allocation2 [shape = 'u8[131072]{0}', space=vmem, size = 0x20000, scoped, tag = 'input window, operand 0']
    #allocation3 [shape = 's32[2]{0}', space=sflag, size = 0x8, scoped, tag = 'scoped memory for tpu_custom_call.1']
    #allocation4 [shape = 's32[2]{0}', space=sflag, size = 0x8, scoped, tag = 'scoped memory for tpu_custom_call.1']
    #allocation5 [shape = 'u8[131072]{0}', space=vmem, size = 0x20000, scoped, tag = 'input window, operand 1']
    #allocation6 [shape = 's32[2]{0}', space=sflag, size = 0x8, scoped, tag = 'scoped memory for tpu_custom_call.1']
    #allocation7 [shape = 'u8[65536]{0}', space=vmem, size = 0x10000, scoped, tag = 'output window, operand 0']
    %7 = vsyncpa [#allocation3], 0
    %s8 = scalar_lea.sflag [#allocation3], 1
    %9 = vsyncpa %s8, 0
    %10 = vsyncpa [#allocation6], 0
    %s11 = scalar_lea.sflag [#allocation6], 1
    %12 = vsyncpa %s11, 0
    %13 = vsyncpa [#allocation4], 0
    %s14 = scalar_lea.sflag [#allocation4], 1
    %15 = vsyncpa %s14, 0
    loop: start=0, step=1, limit=5
    $region2: #{tpu_custom_call.1} parent=1 // loop_pre_header
      _
    $region3: #{tpu_custom_call.1} parent=1 // loop_header
      %s17 = sphi 0, %s21
      %p18 = scmp.ge.s32.totalorder %s17, 5
      %s24 = sphi 0, %s36
      %s25 = sphi 0, %s32
      %s26 = sphi 0, %s24
      %s27 = sphi 0, %s25
      %s28 = sphi 0, %s26
      %s29 = sphi 0, %s27
      %s41 = sphi 0, %s43
      %s44 = sphi 0, %s41
      %s45 = sphi 0, %s44
      %s61 = sphi 0, %s45
      %s67 = sphi 0, %s69
      %s70 = sphi 0, %s67
      %s71 = sphi 0, %s70
      %s87 = sphi 0, %s71
      %s95 = sphi 0, %s97
      %s98 = sphi 0, %s95
      %s99 = sphi 0, %s98
      %s115 = sphi 0, %s99
    $region4: #{tpu_custom_call.1} parent=1 // loop_header_branch
      %20 = sbr.rel (%p18) target = $region8
    $region5: #{tpu_custom_call.1} parent=1 // loop_body
      %s22 = ssub.s32 %s17, 1
      %s23 = ssub.s32 %s17, 2
      %s30 = sadd.s32 1, %s25
      %p31 = scmp.ge.s32.totalorder %s30, 1
      %s32 = scalar_select %p31, 0, %s30
      %s33 = sadd.s32 1, %s24
      %s34 = scalar_select %p31, %s33, %s24
      %p35 = scmp.ge.s32.totalorder %s34, 3
      %s36 = scalar_select %p35, 0, %s34
      %s37 = ssub.s32 %s24, %s36
      %s38 = ssub.s32 %s25, %s32
      %s39 = sor.u32 %s37, %s38
      %p40 = scmp.eq.s32.totalorder %s39, 0
      %s42 = sadd.s32 %s41, 1
      %s43 = scalar_select %p40, %s41, %s42
      %p46 = pneg %p40
      %p47 = scmp.eq.s32.totalorder %s17, 2
      %p48 = por %p46, %p47
      %p49 = scmp.ne.s32.totalorder %s41, %s44
      %p50 = scmp.eq.s32.totalorder %s17, 0
      %p51 = por %p49, %p50
      %p52 = scmp.ne.s32.totalorder %s41, %s44
      %p53 = scmp.eq.s32.totalorder %s22, 2
      %p54 = por %p52, %p53
      %p55 = scmp.ne.s32.totalorder %s44, %s45
      %p56 = scmp.eq.s32.totalorder %s22, 0
      %p57 = por %p55, %p56
      %p58 = scmp.ne.s32.totalorder %s44, %s45
      %p59 = scmp.eq.s32.totalorder %s23, 2
      %p60 = por %p58, %p59
      %p62 = scmp.ne.s32.totalorder %s45, %s61
      %p63 = scmp.eq.s32.totalorder %s23, 0
      %p64 = por %p62, %p63
      %s65 = ssub.s32 %s24, %s36
      %p66 = scmp.eq.s32.totalorder %s65, 0
      %s68 = sadd.s32 %s67, 1
      %s69 = scalar_select %p66, %s67, %s68
      %p72 = pneg %p66
      %p73 = scmp.eq.s32.totalorder %s17, 2
      %p74 = por %p72, %p73
      %p75 = scmp.ne.s32.totalorder %s67, %s70
      %p76 = scmp.eq.s32.totalorder %s17, 0
      %p77 = por %p75, %p76
      %p78 = scmp.ne.s32.totalorder %s67, %s70
      %p79 = scmp.eq.s32.totalorder %s22, 2
      %p80 = por %p78, %p79
      %p81 = scmp.ne.s32.totalorder %s70, %s71
      %p82 = scmp.eq.s32.totalorder %s22, 0
      %p83 = por %p81, %p82
      %p84 = scmp.ne.s32.totalorder %s70, %s71
      %p85 = scmp.eq.s32.totalorder %s23, 2
      %p86 = por %p84, %p85
      %p88 = scmp.ne.s32.totalorder %s71, %s87
      %p89 = scmp.eq.s32.totalorder %s23, 0
      %p90 = por %p88, %p89
      %s91 = ssub.s32 %s24, %s36
      %s92 = ssub.s32 %s25, %s32
      %s93 = sor.u32 %s91, %s92
      %p94 = scmp.eq.s32.totalorder %s93, 0
      %s96 = sadd.s32 %s95, 1
      %s97 = scalar_select %p94, %s95, %s96
      %p100 = pneg %p94
      %p101 = scmp.eq.s32.totalorder %s17, 2
      %p102 = por %p100, %p101
      %p103 = scmp.ne.s32.totalorder %s95, %s98
      %p104 = scmp.eq.s32.totalorder %s17, 0
      %p105 = por %p103, %p104
      %p106 = scmp.ne.s32.totalorder %s95, %s98
      %p107 = scmp.eq.s32.totalorder %s22, 2
      %p108 = por %p106, %p107
      %p109 = scmp.ne.s32.totalorder %s98, %s99
      %p110 = scmp.eq.s32.totalorder %s22, 0
      %p111 = por %p109, %p110
      %p112 = scmp.ne.s32.totalorder %s98, %s99
      %p113 = scmp.eq.s32.totalorder %s23, 2
      %p114 = por %p112, %p113
      %p116 = scmp.ne.s32.totalorder %s99, %s115
      %p117 = scmp.eq.s32.totalorder %s23, 0
      %p118 = por %p116, %p117
      %p119 = scmp.le.s32.totalorder 1, %s17
      %p120 = scmp.lt.s32.totalorder %s17, 4
      %p121 = pnand %p119, %p120
      %p122 = pneg %p121
      // Predicated region
      $region9: #{tpu_custom_call.1} parent=5 // pred_check
        _
      $region10: #{tpu_custom_call.1} parent=5 // pred_check_branch
        %124 = sbr.rel (%p121) target = $region12
      $region11: #{tpu_custom_call.1} parent=5 // pred_region
        %s125 = ssub.s32 %s17, 1
      $region12: #{tpu_custom_call.1} parent=5 // pred_fallthru
        _
      %p126 = scmp.lt.s32.totalorder %s17, 3
      // Predicated region
      $region13: #{tpu_custom_call.1} parent=5 // pred_check
        %p127 = pneg %p126
      $region14: #{tpu_custom_call.1} parent=5 // pred_check_branch
        %129 = sbr.rel (%p127) target = $region16
      $region15: #{tpu_custom_call.1} parent=5 // pred_region
        // Predicated region
        $region17: #{tpu_custom_call.1} parent=15 // pred_check
          %p130 = pneg %p51
        $region18: #{tpu_custom_call.1} parent=15 // pred_check_branch
          %132 = sbr.rel (%p130) target = $region20
        $region19: #{tpu_custom_call.1} parent=15 // pred_region
          %s133 = sand.u32 %s41, 1
          %s134 = scalar_lea.sflag [#allocation3], %s133
          %s135 = sand.u32 %s41, 1
          %s136 = smul.addr %s135, 128
          %s137 = scalar_lea.vmem [#allocation2], %s136
          %s138 = smul.u32 16, %s25
          %140 = vsyncadd %s134, 0
          %s141 = smul.addr %s24, 16
          %s142 = sadd.s32 %s138, %s141
          %s143 = smul.addr %s142, 8
          %s144 = scalar_lea.hbm %s0, %s143
          %s145 = sshll.u32 %s144, 4
          %s146 = int_to_ptr.hbm [resolvable:$true] %s145
          %s147 = sshll.u32 %s137, 4
          %s148 = int_to_ptr.vmem [resolvable:$true] %s147
          %153 = dma.hbm_to_vmem [thread:$0]  %s146, 2048, %s148, %s134, 128, 128, 8
        $region20: #{tpu_custom_call.1} parent=15 // pred_fallthru
          _
        // Predicated region
        $region21: #{tpu_custom_call.1} parent=15 // pred_check
          %p154 = pneg %p77
        $region22: #{tpu_custom_call.1} parent=15 // pred_check_branch
          %156 = sbr.rel (%p154) target = $region24
        $region23: #{tpu_custom_call.1} parent=15 // pred_region
          %s157 = sand.u32 %s67, 1
          %s158 = scalar_lea.sflag [#allocation6], %s157
          %s159 = sand.u32 %s67, 1
          %s160 = smul.addr %s159, 128
          %s161 = scalar_lea.vmem [#allocation5], %s160
          %163 = vsyncadd %s158, 0
          %s164 = smul.addr %s24, 16
          %s165 = smul.addr %s164, 8
          %s166 = scalar_lea.hbm %s1, %s165
          %s167 = sshll.u32 %s166, 4
          %s168 = int_to_ptr.hbm [resolvable:$true] %s167
          %s169 = sshll.u32 %s161, 4
          %s170 = int_to_ptr.vmem [resolvable:$true] %s169
          %175 = dma.hbm_to_vmem [thread:$0]  %s168, 2048, %s170, %s158, 128, 128, 8
        $region24: #{tpu_custom_call.1} parent=15 // pred_fallthru
          _
      $region16: #{tpu_custom_call.1} parent=5 // pred_fallthru
        _
      %p176 = scmp.le.s32.totalorder 1, %s17
      %p177 = scmp.lt.s32.totalorder %s17, 4
      %p178 = pnand %p176, %p177
      %p179 = pneg %p178
      // Predicated region
      $region25: #{tpu_custom_call.1} parent=5 // pred_check
        _
      $region26: #{tpu_custom_call.1} parent=5 // pred_check_branch
        %181 = sbr.rel (%p178) target = $region28
      $region27: #{tpu_custom_call.1} parent=5 // pred_region
        %s182 = ssub.s32 %s17, 1
        %s183 = sand.u32 %s44, 1
        %s184 = scalar_lea.sflag [#allocation3], %s183
        %s185 = sand.u32 %s44, 1
        %s186 = smul.addr %s185, 128
        %s187 = scalar_lea.vmem [#allocation2], %s186
        // Predicated region
        $region29: #{tpu_custom_call.1} parent=27 // pred_check
          %p188 = pneg %p57
        $region30: #{tpu_custom_call.1} parent=27 // pred_check_branch
          %190 = sbr.rel (%p188) target = $region32
        $region31: #{tpu_custom_call.1} parent=27 // pred_region
          %192 = dma.done %s184, 2048
        $region32: #{tpu_custom_call.1} parent=27 // pred_fallthru
          _
        %s193 = sand.u32 %s70, 1
        %s194 = scalar_lea.sflag [#allocation6], %s193
        %s195 = sand.u32 %s70, 1
        %s196 = smul.addr %s195, 128
        %s197 = scalar_lea.vmem [#allocation5], %s196
        // Predicated region
        $region33: #{tpu_custom_call.1} parent=27 // pred_check
          %p198 = pneg %p83
        $region34: #{tpu_custom_call.1} parent=27 // pred_check_branch
          %200 = sbr.rel (%p198) target = $region36
        $region35: #{tpu_custom_call.1} parent=27 // pred_region
          %202 = dma.done %s194, 2048
        $region36: #{tpu_custom_call.1} parent=27 // pred_fallthru
          _
        %s203 = sand.u32 %s44, 1
        %s204 = scalar_lea.sflag [#allocation3], %s203
        %s205 = sand.u32 %s44, 1
        %s206 = smul.addr %s205, 128
        %s207 = scalar_lea.vmem [#allocation2], %s206
        %p208 = pneg %p57
        %p209 = pneg %p54
        %s210 = sand.u32 %s70, 1
        %s211 = scalar_lea.sflag [#allocation6], %s210
        %s212 = sand.u32 %s70, 1
        %s213 = smul.addr %s212, 128
        %s214 = scalar_lea.vmem [#allocation5], %s213
        %p215 = pneg %p83
        %p216 = pneg %p80
        %p217 = pneg %p111
        %p218 = pneg %p108
        %s219 = sand.u32 %s98, 1
        %s220 = scalar_lea.sflag [#allocation4], %s219
        %s221 = sand.u32 %s98, 1
        %s222 = smul.addr %s221, 64
        %s223 = scalar_lea.vmem [#allocation7], %s222
        %s224 = smul.u32 16, %s27
        %s225 = smul.u32 16, %s27
        %v226 = vld [vmem:[%s187] sm:$0xff]
        %v227 = vld [vmem:[%s187 + $0x8] sm:$0xff]
        %v228 = vld [vmem:[%s187 + $0x10] sm:$0xff]
        %v229 = vld [vmem:[%s187 + $0x18] sm:$0xff]
        %v230 = vld [vmem:[%s187 + $0x20] sm:$0xff]
        %v231 = vld [vmem:[%s187 + $0x28] sm:$0xff]
        %v232 = vld [vmem:[%s187 + $0x30] sm:$0xff]
        %v233 = vld [vmem:[%s187 + $0x38] sm:$0xff]
        %v234 = vld [vmem:[%s187 + $0x40] sm:$0xff]
        %v235 = vld [vmem:[%s187 + $0x48] sm:$0xff]
        %v236 = vld [vmem:[%s187 + $0x50] sm:$0xff]
        %v237 = vld [vmem:[%s187 + $0x58] sm:$0xff]
        %v238 = vld [vmem:[%s187 + $0x60] sm:$0xff]
        %v239 = vld [vmem:[%s187 + $0x68] sm:$0xff]
        %v240 = vld [vmem:[%s187 + $0x70] sm:$0xff]
        %v241 = vld [vmem:[%s187 + $0x78] sm:$0xff]
        %v242 = vld [vmem:[%s197] sm:$0xff]
        %v243 = vld [vmem:[%s197 + $0x8] sm:$0xff]
        %v244 = vld [vmem:[%s197 + $0x10] sm:$0xff]
        %v245 = vld [vmem:[%s197 + $0x18] sm:$0xff]
        %v246 = vld [vmem:[%s197 + $0x20] sm:$0xff]
        %v247 = vld [vmem:[%s197 + $0x28] sm:$0xff]
        %v248 = vld [vmem:[%s197 + $0x30] sm:$0xff]
        %v249 = vld [vmem:[%s197 + $0x38] sm:$0xff]
        %v250 = vld [vmem:[%s197 + $0x40] sm:$0xff]
        %v251 = vld [vmem:[%s197 + $0x48] sm:$0xff]
        %v252 = vld [vmem:[%s197 + $0x50] sm:$0xff]
        %v253 = vld [vmem:[%s197 + $0x58] sm:$0xff]
        %v254 = vld [vmem:[%s197 + $0x60] sm:$0xff]
        %v255 = vld [vmem:[%s197 + $0x68] sm:$0xff]
        %v256 = vld [vmem:[%s197 + $0x70] sm:$0xff]
        %v257 = vld [vmem:[%s197 + $0x78] sm:$0xff]
        %258 = vmatpush.msra.mxu0 %v257
        %259 = vmatpush.msra.mxu0 %v256
        %260 = vmatpush.msra.mxu0 %v255
        %261 = vmatpush.msra.mxu0 %v254
        %262 = vmatpush.msra.mxu0 %v253
        %263 = vmatpush.msra.mxu0 %v252
        %264 = vmatpush.msra.mxu0 %v251
        %265 = vmatpush.msra.mxu0 %v250
        %266 = vmatpush.msra.mxu0 %v249
        %267 = vmatpush.msra.mxu0 %v248
        %268 = vmatpush.msra.mxu0 %v247
        %269 = vmatpush.msra.mxu0 %v246
        %270 = vmatpush.msra.mxu0 %v245
        %271 = vmatpush.msra.mxu0 %v244
        %272 = vmatpush.msra.mxu0 %v243
        %273 = vmatpush.msra.mxu0 %v242
        %274 = vmatmul.f32.gmra.mxu0 %v226
        %v275 = vpop.f32.mrf.mxu0
        %v276 = vadd.f32 0.0, %v275
        %277 = vmatmul.f32.gmra.mxu0 %v227
        %v278 = vpop.f32.mrf.mxu0
        %v279 = vadd.f32 0.0, %v278
        %280 = vmatmul.f32.gmra.mxu0 %v228
        %v281 = vpop.f32.mrf.mxu0
        %v282 = vadd.f32 0.0, %v281
        %283 = vmatmul.f32.gmra.mxu0 %v229
        %v284 = vpop.f32.mrf.mxu0
        %v285 = vadd.f32 0.0, %v284
        %286 = vmatmul.f32.gmra.mxu0 %v230
        %v287 = vpop.f32.mrf.mxu0
        %v288 = vadd.f32 0.0, %v287
        %289 = vmatmul.f32.gmra.mxu0 %v231
        %v290 = vpop.f32.mrf.mxu0
        %v291 = vadd.f32 0.0, %v290
        %292 = vmatmul.f32.gmra.mxu0 %v232
        %v293 = vpop.f32.mrf.mxu0
        %v294 = vadd.f32 0.0, %v293
        %295 = vmatmul.f32.gmra.mxu0 %v233
        %v296 = vpop.f32.mrf.mxu0
        %v297 = vadd.f32 0.0, %v296
        %298 = vmatmul.f32.gmra.mxu0 %v234
        %v299 = vpop.f32.mrf.mxu0
        %v300 = vadd.f32 0.0, %v299
        %301 = vmatmul.f32.gmra.mxu0 %v235
        %v302 = vpop.f32.mrf.mxu0
        %v303 = vadd.f32 0.0, %v302
        %304 = vmatmul.f32.gmra.mxu0 %v236
        %v305 = vpop.f32.mrf.mxu0
        %v306 = vadd.f32 0.0, %v305
        %307 = vmatmul.f32.gmra.mxu0 %v237
        %v308 = vpop.f32.mrf.mxu0
        %v309 = vadd.f32 0.0, %v308
        %310 = vmatmul.f32.gmra.mxu0 %v238
        %v311 = vpop.f32.mrf.mxu0
        %v312 = vadd.f32 0.0, %v311
        %313 = vmatmul.f32.gmra.mxu0 %v239
        %v314 = vpop.f32.mrf.mxu0
        %v315 = vadd.f32 0.0, %v314
        %316 = vmatmul.f32.gmra.mxu0 %v240
        %v317 = vpop.f32.mrf.mxu0
        %v318 = vadd.f32 0.0, %v317
        %319 = vmatmul.f32.gmra.mxu0 %v241
        %v320 = vpop.f32.mrf.mxu0
        %v321 = vadd.f32 0.0, %v320
        %322 = vdwg.mxu0
        %v323 = vpack.c.bf16 %v276, %v276
        %v324 = vpack.c.bf16 %v279, %v279
        %v325 = vpack.c.bf16 %v282, %v282
        %v326 = vpack.c.bf16 %v285, %v285
        %v327 = vpack.c.bf16 %v288, %v288
        %v328 = vpack.c.bf16 %v291, %v291
        %v329 = vpack.c.bf16 %v294, %v294
        %v330 = vpack.c.bf16 %v297, %v297
        %v331 = vpack.c.bf16 %v300, %v300
        %v332 = vpack.c.bf16 %v303, %v303
        %v333 = vpack.c.bf16 %v306, %v306
        %v334 = vpack.c.bf16 %v309, %v309
        %v335 = vpack.c.bf16 %v312, %v312
        %v336 = vpack.c.bf16 %v315, %v315
        %v337 = vpack.c.bf16 %v318, %v318
        %v338 = vpack.c.bf16 %v321, %v321
        %339 = vst [vmem:[%s223] sm:$0xf] %v323
        %340 = vst [vmem:[%s223 + $0x4] sm:$0xf] %v324
        %341 = vst [vmem:[%s223 + $0x8] sm:$0xf] %v325
        %342 = vst [vmem:[%s223 + $0xc] sm:$0xf] %v326
        %343 = vst [vmem:[%s223 + $0x10] sm:$0xf] %v327
        %344 = vst [vmem:[%s223 + $0x14] sm:$0xf] %v328
        %345 = vst [vmem:[%s223 + $0x18] sm:$0xf] %v329
        %346 = vst [vmem:[%s223 + $0x1c] sm:$0xf] %v330
        %347 = vst [vmem:[%s223 + $0x20] sm:$0xf] %v331
        %348 = vst [vmem:[%s223 + $0x24] sm:$0xf] %v332
        %349 = vst [vmem:[%s223 + $0x28] sm:$0xf] %v333
        %350 = vst [vmem:[%s223 + $0x2c] sm:$0xf] %v334
        %351 = vst [vmem:[%s223 + $0x30] sm:$0xf] %v335
        %352 = vst [vmem:[%s223 + $0x34] sm:$0xf] %v336
        %353 = vst [vmem:[%s223 + $0x38] sm:$0xf] %v337
        %354 = vst [vmem:[%s223 + $0x3c] sm:$0xf] %v338
        %s355 = sand.u32 %s98, 1
        %s356 = scalar_lea.sflag [#allocation4], %s355
        %s357 = sand.u32 %s98, 1
        %s358 = smul.addr %s357, 64
        %s359 = scalar_lea.vmem [#allocation7], %s358
        // Predicated region
        $region37: #{tpu_custom_call.1} parent=27 // pred_check
          %p360 = pneg %p108
        $region38: #{tpu_custom_call.1} parent=27 // pred_check_branch
          %362 = sbr.rel (%p360) target = $region40
        $region39: #{tpu_custom_call.1} parent=27 // pred_region
          %s363 = smul.u32 16, %s27
          %365 = vsyncadd %s356, 0
          %s366 = smul.addr %s26, 16
          %s367 = sadd.s32 %s363, %s366
          %s368 = smul.addr %s367, 4
          %s369 = scalar_lea.hbm %s2, %s368
          %s370 = sshll.u32 %s359, 4
          %s371 = int_to_ptr.vmem [resolvable:$true] %s370
          %s372 = sshll.u32 %s369, 4
          %s373 = int_to_ptr.hbm [resolvable:$true] %s372
          %378 = dma.vmem_to_hbm [thread:$0]  %s371, 1024, %s373, %s356, 64, 64, 4
        $region40: #{tpu_custom_call.1} parent=27 // pred_fallthru
          _
      $region28: #{tpu_custom_call.1} parent=5 // pred_fallthru
        _
      %p379 = scmp.le.s32.totalorder 2, %s17
      // Predicated region
      $region41: #{tpu_custom_call.1} parent=5 // pred_check
        %p380 = pneg %p379
      $region42: #{tpu_custom_call.1} parent=5 // pred_check_branch
        %382 = sbr.rel (%p380) target = $region44
      $region43: #{tpu_custom_call.1} parent=5 // pred_region
        %s383 = ssub.s32 %s17, 2
        // Predicated region
        $region45: #{tpu_custom_call.1} parent=43 // pred_check
          %p384 = pneg %p114
        $region46: #{tpu_custom_call.1} parent=43 // pred_check_branch
          %386 = sbr.rel (%p384) target = $region48
        $region47: #{tpu_custom_call.1} parent=43 // pred_region
          %s387 = sand.u32 %s99, 1
          %s388 = scalar_lea.sflag [#allocation4], %s387
          %s389 = sand.u32 %s99, 1
          %s390 = smul.addr %s389, 64
          %s391 = scalar_lea.vmem [#allocation7], %s390
          %393 = dma.done %s388, 1024
        $region48: #{tpu_custom_call.1} parent=43 // pred_fallthru
          _
      $region44: #{tpu_custom_call.1} parent=5 // pred_fallthru
        _
    $region6: #{tpu_custom_call.1} parent=1 // loop_footer
      %s21 = sadd.s32 1, %s17
    $region7: #{tpu_custom_call.1} parent=1 // loop_footer_branch
      %16 = sbr.rel target = $region3
    $region8: #{tpu_custom_call.1} parent=1 // loop_exit
      _
    %394 = vsyncpa [#allocation3], 1
    %s395 = scalar_lea.sflag [#allocation3], 1
    %396 = vsyncpa %s395, 1
    %397 = vsyncpa [#allocation6], 1
    %s398 = scalar_lea.sflag [#allocation6], 1
    %399 = vsyncpa %s398, 1
    %400 = vsyncpa [#allocation4], 1
    %s401 = scalar_lea.sflag [#allocation4], 1
    %402 = vsyncpa %s401, 1

</llo_original>
